<compile_context>
chip_gen: v6e
topology: v6e:2x2x1
jax: 0.10.0
libtpu: 0.0.40
codegen_flags: <defaults>
</compile_context>

<pallas_src>
import functools

import jax
import jax.numpy as jnp
import numpy as np
from jax import lax
from jax.experimental import pallas as pl
from jax.experimental.pallas import tpu as pltpu


def _round_up(x, m):
    return ((x + m - 1) // m) * m


def _vmem_capacity_bytes():
    """Physical VMEM of the attached TPU (fallback: 128 MiB)."""
    try:
        return int(pltpu.get_tpu_info().vmem_capacity_bytes)
    except Exception:
        return 128 * 1024 * 1024


def _attention_kernel(x_ref, wq_ref, wkv_ref, wo_ref, bo_ref, o_ref,
                      kv_scr, y_scr, *, num_heads, seq_len, q_tile):
    qi = pl.program_id(1)
    H = num_heads
    TQ = q_tile
    _, N_pad, C = x_ref.shape
    Dh = C // H

    # ---- K/V projection: once per batch element (first q-block), cached in a
    #      lane-dense (N_pad, 2C) bf16 VMEM scratch via one fused MXU matmul.
    @pl.when(qi == 0)
    def _():
        x_full = x_ref[0].astype(jnp.bfloat16)                       # (N_pad, C)
        kv_scr[...] = jnp.dot(
            x_full, wkv_ref[...],
            preferred_element_type=jnp.float32).astype(kv_scr.dtype)  # (N_pad, 2C)

    # ---- Q projection for this query tile (qk scale folded into wq).
    #      The tile is a static-stride slice of the block already in VMEM.
    start = pl.multiple_of(qi * TQ, 8)
    xq = x_ref[0, pl.ds(start, TQ), :].astype(jnp.bfloat16)          # (TQ, C)
    q = jnp.dot(xq, wq_ref[...],
                preferred_element_type=jnp.float32).astype(jnp.bfloat16)

    k = kv_scr[:, :C]                                                # (N_pad, C) bf16
    v = kv_scr[:, C:]                                                # (N_pad, C) bf16

    # Mask padded key columns (only materialized when N was padded).
    if N_pad != seq_len:
        col = lax.broadcasted_iota(jnp.int32, (TQ, N_pad), 1)
        score_mask = jnp.where(col < seq_len,
                               jnp.float32(0.0), jnp.float32(-1e30))
    else:
        score_mask = None

    # ---- Per-head attention. Head slices are static lane slices; each
    #      normalized head output is committed to the (TQ, C) bf16 scratch
    #      immediately (no list + concatenate, low vreg pressure).
    # NOTE: for H >= 8 this should be rolled with lax.fori_loop over pl.ds
    #       head slices to avoid code/live-range blowup.
    for h in range(H):
        lo = h * Dh
        q_h = q[:, lo:lo + Dh]                                        # (TQ, Dh)
        k_h = k[:, lo:lo + Dh]                                        # (N_pad, Dh)
        v_h = v[:, lo:lo + Dh]                                        # (N_pad, Dh)
        s = jnp.einsum("qd,kd->qk", q_h, k_h,
                       preferred_element_type=jnp.float32)            # (TQ, N_pad) f32
        if score_mask is not None:
            s = s + score_mask
        m = jnp.max(s, axis=-1, keepdims=True)
        p = jnp.exp(s - m)                                            # f32 softmax math
        l = jnp.sum(p, axis=-1, keepdims=True)
        o_h = jnp.dot(p.astype(jnp.bfloat16), v_h,
                      preferred_element_type=jnp.float32)              # (TQ, Dh) f32
        # Deferred normalization on the small output; reciprocal goes to EUP.
        y_scr[:, lo:lo + Dh] = (o_h * pl.reciprocal(l, approx=True)
                                ).astype(y_scr.dtype)

    # ---- Output projection: one (TQ, C) @ (C, C) MXU matmul; bias add in f32.
    out = jnp.dot(y_scr[...], wo_ref[...], preferred_element_type=jnp.float32)
    o_ref[0] = (out + bo_ref[...]).astype(o_ref.dtype)


def prepare_attention_params(w_qkv, w_proj, b_proj, num_heads):
    """One-time (model-load) weight rearrangement.

    w_qkv: (3C, C) PyTorch Linear weight, w_proj: (C, C), b_proj: (C,).
    Folds the qk scale into the q projection, fuses K/V weights into a single
    (C, 2C) matrix, transposes to right-multiply layout (x @ W) and casts the
    MXU weights to bf16. Do this once per model, not per forward call.
    """
    C = w_proj.shape[0]
    Dh = C // num_heads
    scale = Dh ** (-0.5)
    wq = (w_qkv[0 * C:1 * C].T * scale).astype(jnp.bfloat16)          # (C, C)
    wkv = jnp.concatenate(
        [w_qkv[1 * C:2 * C].T, w_qkv[2 * C:3 * C].T], axis=1
    ).astype(jnp.bfloat16)                                            # (C, 2C)
    wo = w_proj.T.astype(jnp.bfloat16)                                # (C, C)
    bo = b_proj.reshape(1, C).astype(jnp.float32)                     # (1, C)
    return wq, wkv, wo, bo


def attention_pallas(x, params, num_heads, *, q_block=None):
    """x: (B, N, C) activations; params from prepare_attention_params."""
    B, N, C = x.shape
    wq, wkv, wo, bo = params
    out_dtype = x.dtype

    # Generation-gated VMEM budget / query tile (v7x: 64 MiB -> ~48 MiB, TQ=128;
    # v5e/v6e: 128 MiB -> ~96 MiB, TQ=256).
    vmem_cap = _vmem_capacity_bytes()
    vmem_limit = int(min(0.75 * vmem_cap, 100 * 1024 * 1024))
    if q_block is None:
        q_block = 256 if vmem_cap >= 100 * 1024 * 1024 else 128

    # Balanced query tiles; pad N so TQ * QB covers the sequence exactly.
    if N <= q_block:
        TQ, QB = N, 1
    else:
        QB = pl.cdiv(N, q_block)
        TQ = _round_up(pl.cdiv(N, QB), 8)
    N_pad = TQ * QB

    x_in = x if N_pad == N else jnp.pad(x, ((0, 0), (0, N_pad - N), (0, 0)))

    kernel = functools.partial(_attention_kernel, num_heads=num_heads,
                               seq_len=N, q_tile=TQ)

    Dh = C // num_heads
    itemsize = jnp.dtype(x.dtype).itemsize
    cost = pl.CostEstimate(
        flops=int(2 * B * (4 * N_pad * C * C + 2 * num_heads * N_pad * N_pad * Dh)),
        transcendentals=int(B * num_heads * N_pad * N_pad),
        bytes_accessed=int(2 * B * N_pad * C * itemsize + 4 * C * C * 2 + 4 * C),
    )

    # Weights / bias: whole-array VMEM residents (single copy, no pipelining).
    weight_spec = pl.BlockSpec(memory_space=pltpu.MemorySpace.VMEM)

    out = pl.pallas_call(
        kernel,
        out_shape=jax.ShapeDtypeStruct((B, N_pad, C), out_dtype),
        grid_spec=pltpu.PrefetchScalarGridSpec(
            num_scalar_prefetch=0,
            grid=(B, QB),
            in_specs=[
                # full sequence of x, constant over qi -> fetched once per b;
                # the per-tile query slab is sliced out of it inside the kernel.
                pl.BlockSpec((1, N_pad, C), lambda b, qi: (b, 0, 0)),
                weight_spec,      # wq (scale folded)
                weight_spec,      # wkv (fused K|V)
                weight_spec,      # wo
                weight_spec,      # bo
            ],
            out_specs=pl.BlockSpec((1, TQ, C), lambda b, qi: (b, qi, 0)),
            scratch_shapes=[
                pltpu.VMEM((N_pad, 2 * C), jnp.bfloat16),   # fused K|V cache
                pltpu.VMEM((TQ, C), jnp.bfloat16),          # per-tile head outputs
            ],
        ),
        compiler_params=pltpu.CompilerParams(
            # batch is parallel (megacore / v7x dual-TC); q-blocks are serial so
            # the K/V scratch computed at qi==0 can be reused across query tiles.
            dimension_semantics=("parallel", "arbitrary"),
            vmem_limit_bytes=vmem_limit,
        ),
        cost_estimate=cost,
    )(x_in, wq, wkv, wo, bo)

    return out if N_pad == N else out[:, :N, :]


def attention_reference(x, w_qkv, w_proj, b_proj, num_heads):
    """Pure-JAX f32 reference mirroring the PyTorch forward exactly."""
    B, N, C = x.shape
    H = num_heads
    Dh = C // H
    scale = Dh ** (-0.5)
    qkv = x @ w_qkv.T                                    # (B, N, 3C)
    qkv = qkv.reshape(B, N, 3, H, Dh).transpose(2, 0, 3, 1, 4)
    q, k, v = qkv[0], qkv[1], qkv[2]                     # each (B, H, N, Dh)
    attn = (q @ k.transpose(0, 1, 3, 2)) * scale
    attn = jax.nn.softmax(attn, axis=-1)
    out = attn @ v                                       # (B, H, N, Dh)
    out = out.transpose(0, 2, 1, 3).reshape(B, N, C)
    return out @ w_proj.T + b_proj


if __name__ == "__main__":
    B, N, C, H = 2, 8, 32, 4  # batch, seq, embed_dim, num_heads

    key = jax.random.PRNGKey(0)
    k_x, k_qkv, k_proj, k_bias = jax.random.split(key, 4)

    x = jax.random.normal(k_x, (B, N, C), dtype=jnp.float32)
    # Deterministic synthetic parameters (qkv_bias=False per module defaults).
    w_qkv = jax.random.normal(k_qkv, (3 * C, C), dtype=jnp.float32) * 0.05
    w_proj = jax.random.normal(k_proj, (C, C), dtype=jnp.float32) * 0.05
    b_proj = jax.random.normal(k_bias, (C,), dtype=jnp.float32) * 0.05

    params = prepare_attention_params(w_qkv, w_proj, b_proj, num_heads=H)

    # Test 1: single query tile.
    out = jax.block_until_ready(attention_pallas(x, params, num_heads=H))
    ref = attention_reference(x, w_qkv, w_proj, b_proj, num_heads=H)
    # bf16 MXU operands (f32 accumulation, f32 softmax) -> loosened tolerance.
    np.testing.assert_allclose(np.asarray(out), np.asarray(ref), rtol=5e-2, atol=1e-2)

    # Test 2: multiple query tiles with N not divisible by the tile
    #         (exercises padding + key-column masking).
    N2 = 200
    x2 = jax.random.normal(jax.random.PRNGKey(1), (B, N2, C), dtype=jnp.float32)
    out2 = jax.block_until_ready(
        attention_pallas(x2, params, num_heads=H, q_block=64))
    ref2 = attention_reference(x2, w_qkv, w_proj, b_proj, num_heads=H)
    np.testing.assert_allclose(np.asarray(out2), np.asarray(ref2), rtol=5e-2, atol=1e-2)

    print("KERNEL_OK")
</pallas_src>

<mosaic_0001>
module attributes {stable_mosaic.version = 11 : i64} {
  func.func @_attention_kernel(%arg0: i32, %arg1: i32, %arg2: memref<1x8x32xf32, #tpu.memory_space<vmem>>, %arg3: memref<32x32xbf16, #tpu.memory_space<vmem>>, %arg4: memref<32x64xbf16, #tpu.memory_space<vmem>>, %arg5: memref<32x32xbf16, #tpu.memory_space<vmem>>, %arg6: memref<1x32xf32, #tpu.memory_space<vmem>>, %arg7: memref<1x8x32xf32, #tpu.memory_space<vmem>>, %arg8: memref<8x64xbf16, #tpu.memory_space<vmem>>, %arg9: memref<8x32xbf16, #tpu.memory_space<vmem>>) attributes {dimension_semantics = [#tpu.dimension_semantics<parallel>, #tpu.dimension_semantics<arbitrary>], iteration_bounds = array<i64: 2, 1>, scalar_prefetch = 0 : i64, scratch_operands = 2 : i64, tpu.core_type = #tpu.core_type<tc>, window_params = [{transform_indices = @transform_0, window_bounds = array<i64: 1, 8, 32>}, {pipeline_mode = #tpu.pipeline_mode<synchronous>, transform_indices = @transform_1, window_bounds = array<i64: 32, 32>}, {pipeline_mode = #tpu.pipeline_mode<synchronous>, transform_indices = @transform_2, window_bounds = array<i64: 32, 64>}, {pipeline_mode = #tpu.pipeline_mode<synchronous>, transform_indices = @transform_3, window_bounds = array<i64: 32, 32>}, {pipeline_mode = #tpu.pipeline_mode<synchronous>, transform_indices = @transform_4, window_bounds = array<i64: 1, 32>}, {transform_indices = @transform_5, window_bounds = array<i64: 1, 8, 32>}]} {
    %c0_i32 = arith.constant 0 : i32
    %0 = arith.cmpi eq, %arg1, %c0_i32 : i32
    %1 = arith.extui %0 : i1 to i32
    %c0_i32_0 = arith.constant 0 : i32
    %2 = arith.cmpi ne, %1, %c0_i32_0 : i32
    scf.if %2 {
      %c0_38 = arith.constant 0 : index
      %c0_39 = arith.constant 0 : index
      %c0_40 = arith.constant 0 : index
      %95 = vector.load %arg2[%c0_38, %c0_39, %c0_40] : memref<1x8x32xf32, #tpu.memory_space<vmem>>, vector<1x8x32xf32>
      %96 = vector.shape_cast %95 : vector<1x8x32xf32> to vector<8x32xf32>
      %97 = arith.truncf %96 : vector<8x32xf32> to vector<8x32xbf16>
      %c0_41 = arith.constant 0 : index
      %c0_42 = arith.constant 0 : index
      %98 = vector.load %arg4[%c0_41, %c0_42] : memref<32x64xbf16, #tpu.memory_space<vmem>>, vector<32x64xbf16>
      %cst_43 = arith.constant dense<0.000000e+00> : vector<8x64xf32>
      %99 = tpu.matmul %97, %98, %cst_43 {dimension_numbers = #tpu.dot_dimension_numbers<[1], [0], [0], [1], [0, 0, 1, 1], [], []>} : vector<8x32xbf16>, vector<32x64xbf16>, vector<8x64xf32> -> vector<8x64xf32>
      %100 = arith.truncf %99 : vector<8x64xf32> to vector<8x64xbf16>
      %c0_44 = arith.constant 0 : index
      %c0_45 = arith.constant 0 : index
      %101 = vector.load %arg8[%c0_44, %c0_45] : memref<8x64xbf16, #tpu.memory_space<vmem>>, vector<8x64xbf16>
      tpu.vector_store %arg8[%c0_44, %c0_45], %100 {strides = array<i32>} : memref<8x64xbf16, #tpu.memory_space<vmem>>, vector<8x64xbf16>,
    } else {
    }
    %c8_i32 = arith.constant 8 : i32
    %3 = arith.muli %arg1, %c8_i32 : i32
    %4 = tpu.assume_multiple %3, 8 : i32
    %c0 = arith.constant 0 : index
    %5 = arith.index_cast %4 : i32 to index
    %c0_1 = arith.constant 0 : index
    %6 = vector.load %arg2[%c0, %5, %c0_1] : memref<1x8x32xf32, #tpu.memory_space<vmem>>, vector<1x8x32xf32>
    %7 = vector.shape_cast %6 : vector<1x8x32xf32> to vector<8x32xf32>
    %8 = arith.truncf %7 : vector<8x32xf32> to vector<8x32xbf16>
    %c0_2 = arith.constant 0 : index
    %c0_3 = arith.constant 0 : index
    %9 = vector.load %arg3[%c0_2, %c0_3] : memref<32x32xbf16, #tpu.memory_space<vmem>>, vector<32x32xbf16>
    %cst = arith.constant dense<0.000000e+00> : vector<8x32xf32>
    %10 = tpu.matmul %8, %9, %cst {dimension_numbers = #tpu.dot_dimension_numbers<[1], [0], [0], [1], [0, 0, 1, 1], [], []>} : vector<8x32xbf16>, vector<32x32xbf16>, vector<8x32xf32> -> vector<8x32xf32>
    %11 = arith.truncf %10 : vector<8x32xf32> to vector<8x32xbf16>
    %c0_4 = arith.constant 0 : index
    %c0_5 = arith.constant 0 : index
    %12 = vector.load %arg8[%c0_4, %c0_5] : memref<8x64xbf16, #tpu.memory_space<vmem>>, vector<8x32xbf16>
    %c0_6 = arith.constant 0 : index
    %c32 = arith.constant 32 : index
    %13 = vector.load %arg8[%c0_6, %c32] : memref<8x64xbf16, #tpu.memory_space<vmem>>, vector<8x32xbf16>
    %14 = vector.extract_strided_slice %11 {offsets = [0, 0], sizes = [8, 8], strides = [1, 1]} : vector<8x32xbf16> to vector<8x8xbf16>
    %15 = vector.extract_strided_slice %12 {offsets = [0, 0], sizes = [8, 8], strides = [1, 1]} : vector<8x32xbf16> to vector<8x8xbf16>
    %16 = vector.extract_strided_slice %13 {offsets = [0, 0], sizes = [8, 8], strides = [1, 1]} : vector<8x32xbf16> to vector<8x8xbf16>
    "tpu.trace_start"() <{level = 10 : i32, message = "qd,kd->qk"}> : () -> ()
    %cst_7 = arith.constant dense<0.000000e+00> : vector<8x8xf32>
    %17 = tpu.matmul %14, %15, %cst_7 {dimension_numbers = #tpu.dot_dimension_numbers<[1], [1], [0], [0], [0, 0, 1, 0], [], []>} : vector<8x8xbf16>, vector<8x8xbf16>, vector<8x8xf32> -> vector<8x8xf32>
    "tpu.trace_stop"() : () -> ()
    %cst_8 = arith.constant dense<0xFF800000> : vector<8xf32>
    %18 = vector.multi_reduction <maximumf>, %17, %cst_8 [1] : vector<8x8xf32> to vector<8xf32>
    %19 = vector.shape_cast %18 : vector<8xf32> to vector<8x1xf32>
    %20 = vector.broadcast %19 : vector<8x1xf32> to vector<8x8xf32>
    %21 = arith.subf %17, %20 : vector<8x8xf32>
    %22 = math.exp %21 : vector<8x8xf32>
    %cst_9 = arith.constant dense<0.000000e+00> : vector<8xf32>
    %23 = vector.multi_reduction <add>, %22, %cst_9 [1] : vector<8x8xf32> to vector<8xf32>
    %24 = vector.shape_cast %23 : vector<8xf32> to vector<8x1xf32>
    %25 = arith.truncf %22 : vector<8x8xf32> to vector<8x8xbf16>
    %cst_10 = arith.constant dense<0.000000e+00> : vector<8x8xf32>
    %26 = tpu.matmul %25, %16, %cst_10 {dimension_numbers = #tpu.dot_dimension_numbers<[1], [0], [0], [1], [0, 0, 1, 1], [], []>} : vector<8x8xbf16>, vector<8x8xbf16>, vector<8x8xf32> -> vector<8x8xf32>
    %27 = tpu.reciprocal %24 {approx = true} : vector<8x1xf32> -> vector<8x1xf32>
    %28 = vector.broadcast %27 : vector<8x1xf32> to vector<8x8xf32>
    %29 = arith.mulf %26, %28 : vector<8x8xf32>
    %30 = arith.truncf %29 : vector<8x8xf32> to vector<8x8xbf16>
    %c0_11 = arith.constant 0 : index
    %c0_12 = arith.constant 0 : index
    %31 = vector.load %arg9[%c0_11, %c0_12] : memref<8x32xbf16, #tpu.memory_space<vmem>>, vector<8x8xbf16>
    tpu.vector_store %arg9[%c0_11, %c0_12], %30 {strides = array<i32>} : memref<8x32xbf16, #tpu.memory_space<vmem>>, vector<8x8xbf16>,
    %32 = vector.extract_strided_slice %11 {offsets = [0, 8], sizes = [8, 8], strides = [1, 1]} : vector<8x32xbf16> to vector<8x8xbf16>
    %33 = vector.extract_strided_slice %12 {offsets = [0, 8], sizes = [8, 8], strides = [1, 1]} : vector<8x32xbf16> to vector<8x8xbf16>
    %34 = vector.extract_strided_slice %13 {offsets = [0, 8], sizes = [8, 8], strides = [1, 1]} : vector<8x32xbf16> to vector<8x8xbf16>
    "tpu.trace_start"() <{level = 10 : i32, message = "qd,kd->qk"}> : () -> ()
    %cst_13 = arith.constant dense<0.000000e+00> : vector<8x8xf32>
    %35 = tpu.matmul %32, %33, %cst_13 {dimension_numbers = #tpu.dot_dimension_numbers<[1], [1], [0], [0], [0, 0, 1, 0], [], []>} : vector<8x8xbf16>, vector<8x8xbf16>, vector<8x8xf32> -> vector<8x8xf32>
    "tpu.trace_stop"() : () -> ()
    %cst_14 = arith.constant dense<0xFF800000> : vector<8xf32>
    %36 = vector.multi_reduction <maximumf>, %35, %cst_14 [1] : vector<8x8xf32> to vector<8xf32>
    %37 = vector.shape_cast %36 : vector<8xf32> to vector<8x1xf32>
    %38 = vector.broadcast %37 : vector<8x1xf32> to vector<8x8xf32>
    %39 = arith.subf %35, %38 : vector<8x8xf32>
    %40 = math.exp %39 : vector<8x8xf32>
    %cst_15 = arith.constant dense<0.000000e+00> : vector<8xf32>
    %41 = vector.multi_reduction <add>, %40, %cst_15 [1] : vector<8x8xf32> to vector<8xf32>
    %42 = vector.shape_cast %41 : vector<8xf32> to vector<8x1xf32>
    %43 = arith.truncf %40 : vector<8x8xf32> to vector<8x8xbf16>
    %cst_16 = arith.constant dense<0.000000e+00> : vector<8x8xf32>
    %44 = tpu.matmul %43, %34, %cst_16 {dimension_numbers = #tpu.dot_dimension_numbers<[1], [0], [0], [1], [0, 0, 1, 1], [], []>} : vector<8x8xbf16>, vector<8x8xbf16>, vector<8x8xf32> -> vector<8x8xf32>
    %45 = tpu.reciprocal %42 {approx = true} : vector<8x1xf32> -> vector<8x1xf32>
    %46 = vector.broadcast %45 : vector<8x1xf32> to vector<8x8xf32>
    %47 = arith.mulf %44, %46 : vector<8x8xf32>
    %48 = arith.truncf %47 : vector<8x8xf32> to vector<8x8xbf16>
    %c0_17 = arith.constant 0 : index
    %c8 = arith.constant 8 : index
    %49 = vector.load %arg9[%c0_17, %c8] : memref<8x32xbf16, #tpu.memory_space<vmem>>, vector<8x8xbf16>
    tpu.vector_store %arg9[%c0_17, %c8], %48 {strides = array<i32>} : memref<8x32xbf16, #tpu.memory_space<vmem>>, vector<8x8xbf16>,
    %50 = vector.extract_strided_slice %11 {offsets = [0, 16], sizes = [8, 8], strides = [1, 1]} : vector<8x32xbf16> to vector<8x8xbf16>
    %51 = vector.extract_strided_slice %12 {offsets = [0, 16], sizes = [8, 8], strides = [1, 1]} : vector<8x32xbf16> to vector<8x8xbf16>
    %52 = vector.extract_strided_slice %13 {offsets = [0, 16], sizes = [8, 8], strides = [1, 1]} : vector<8x32xbf16> to vector<8x8xbf16>
    "tpu.trace_start"() <{level = 10 : i32, message = "qd,kd->qk"}> : () -> ()
    %cst_18 = arith.constant dense<0.000000e+00> : vector<8x8xf32>
    %53 = tpu.matmul %50, %51, %cst_18 {dimension_numbers = #tpu.dot_dimension_numbers<[1], [1], [0], [0], [0, 0, 1, 0], [], []>} : vector<8x8xbf16>, vector<8x8xbf16>, vector<8x8xf32> -> vector<8x8xf32>
    "tpu.trace_stop"() : () -> ()
    %cst_19 = arith.constant dense<0xFF800000> : vector<8xf32>
    %54 = vector.multi_reduction <maximumf>, %53, %cst_19 [1] : vector<8x8xf32> to vector<8xf32>
    %55 = vector.shape_cast %54 : vector<8xf32> to vector<8x1xf32>
    %56 = vector.broadcast %55 : vector<8x1xf32> to vector<8x8xf32>
    %57 = arith.subf %53, %56 : vector<8x8xf32>
    %58 = math.exp %57 : vector<8x8xf32>
    %cst_20 = arith.constant dense<0.000000e+00> : vector<8xf32>
    %59 = vector.multi_reduction <add>, %58, %cst_20 [1] : vector<8x8xf32> to vector<8xf32>
    %60 = vector.shape_cast %59 : vector<8xf32> to vector<8x1xf32>
    %61 = arith.truncf %58 : vector<8x8xf32> to vector<8x8xbf16>
    %cst_21 = arith.constant dense<0.000000e+00> : vector<8x8xf32>
    %62 = tpu.matmul %61, %52, %cst_21 {dimension_numbers = #tpu.dot_dimension_numbers<[1], [0], [0], [1], [0, 0, 1, 1], [], []>} : vector<8x8xbf16>, vector<8x8xbf16>, vector<8x8xf32> -> vector<8x8xf32>
    %63 = tpu.reciprocal %60 {approx = true} : vector<8x1xf32> -> vector<8x1xf32>
    %64 = vector.broadcast %63 : vector<8x1xf32> to vector<8x8xf32>
    %65 = arith.mulf %62, %64 : vector<8x8xf32>
    %66 = arith.truncf %65 : vector<8x8xf32> to vector<8x8xbf16>
    %c0_22 = arith.constant 0 : index
    %c16 = arith.constant 16 : index
    %67 = vector.load %arg9[%c0_22, %c16] : memref<8x32xbf16, #tpu.memory_space<vmem>>, vector<8x8xbf16>
    tpu.vector_store %arg9[%c0_22, %c16], %66 {strides = array<i32>} : memref<8x32xbf16, #tpu.memory_space<vmem>>, vector<8x8xbf16>,
    %68 = vector.extract_strided_slice %11 {offsets = [0, 24], sizes = [8, 8], strides = [1, 1]} : vector<8x32xbf16> to vector<8x8xbf16>
    %69 = vector.extract_strided_slice %12 {offsets = [0, 24], sizes = [8, 8], strides = [1, 1]} : vector<8x32xbf16> to vector<8x8xbf16>
    %70 = vector.extract_strided_slice %13 {offsets = [0, 24], sizes = [8, 8], strides = [1, 1]} : vector<8x32xbf16> to vector<8x8xbf16>
    "tpu.trace_start"() <{level = 10 : i32, message = "qd,kd->qk"}> : () -> ()
    %cst_23 = arith.constant dense<0.000000e+00> : vector<8x8xf32>
    %71 = tpu.matmul %68, %69, %cst_23 {dimension_numbers = #tpu.dot_dimension_numbers<[1], [1], [0], [0], [0, 0, 1, 0], [], []>} : vector<8x8xbf16>, vector<8x8xbf16>, vector<8x8xf32> -> vector<8x8xf32>
    "tpu.trace_stop"() : () -> ()
    %cst_24 = arith.constant dense<0xFF800000> : vector<8xf32>
    %72 = vector.multi_reduction <maximumf>, %71, %cst_24 [1] : vector<8x8xf32> to vector<8xf32>
    %73 = vector.shape_cast %72 : vector<8xf32> to vector<8x1xf32>
    %74 = vector.broadcast %73 : vector<8x1xf32> to vector<8x8xf32>
    %75 = arith.subf %71, %74 : vector<8x8xf32>
    %76 = math.exp %75 : vector<8x8xf32>
    %cst_25 = arith.constant dense<0.000000e+00> : vector<8xf32>
    %77 = vector.multi_reduction <add>, %76, %cst_25 [1] : vector<8x8xf32> to vector<8xf32>
    %78 = vector.shape_cast %77 : vector<8xf32> to vector<8x1xf32>
    %79 = arith.truncf %76 : vector<8x8xf32> to vector<8x8xbf16>
    %cst_26 = arith.constant dense<0.000000e+00> : vector<8x8xf32>
    %80 = tpu.matmul %79, %70, %cst_26 {dimension_numbers = #tpu.dot_dimension_numbers<[1], [0], [0], [1], [0, 0, 1, 1], [], []>} : vector<8x8xbf16>, vector<8x8xbf16>, vector<8x8xf32> -> vector<8x8xf32>
    %81 = tpu.reciprocal %78 {approx = true} : vector<8x1xf32> -> vector<8x1xf32>
    %82 = vector.broadcast %81 : vector<8x1xf32> to vector<8x8xf32>
    %83 = arith.mulf %80, %82 : vector<8x8xf32>
    %84 = arith.truncf %83 : vector<8x8xf32> to vector<8x8xbf16>
    %c0_27 = arith.constant 0 : index
    %c24 = arith.constant 24 : index
    %85 = vector.load %arg9[%c0_27, %c24] : memref<8x32xbf16, #tpu.memory_space<vmem>>, vector<8x8xbf16>
    tpu.vector_store %arg9[%c0_27, %c24], %84 {strides = array<i32>} : memref<8x32xbf16, #tpu.memory_space<vmem>>, vector<8x8xbf16>,
    %c0_28 = arith.constant 0 : index
    %c0_29 = arith.constant 0 : index
    %86 = vector.load %arg9[%c0_28, %c0_29] : memref<8x32xbf16, #tpu.memory_space<vmem>>, vector<8x32xbf16>
    %c0_30 = arith.constant 0 : index
    %c0_31 = arith.constant 0 : index
    %87 = vector.load %arg5[%c0_30, %c0_31] : memref<32x32xbf16, #tpu.memory_space<vmem>>, vector<32x32xbf16>
    %cst_32 = arith.constant dense<0.000000e+00> : vector<8x32xf32>
    %88 = tpu.matmul %86, %87, %cst_32 {dimension_numbers = #tpu.dot_dimension_numbers<[1], [0], [0], [1], [0, 0, 1, 1], [], []>} : vector<8x32xbf16>, vector<32x32xbf16>, vector<8x32xf32> -> vector<8x32xf32>
    %c0_33 = arith.constant 0 : index
    %c0_34 = arith.constant 0 : index
    %89 = vector.load %arg6[%c0_33, %c0_34] : memref<1x32xf32, #tpu.memory_space<vmem>>, vector<1x32xf32>
    %90 = vector.broadcast %89 : vector<1x32xf32> to vector<8x32xf32>
    %91 = arith.addf %88, %90 : vector<8x32xf32>
    %c0_35 = arith.constant 0 : index
    %c0_36 = arith.constant 0 : index
    %c0_37 = arith.constant 0 : index
    %92 = vector.load %arg7[%c0_35, %c0_36, %c0_37] : memref<1x8x32xf32, #tpu.memory_space<vmem>>, vector<1x8x32xf32>
    %93 = vector.shape_cast %92 : vector<1x8x32xf32> to vector<8x32xf32>
    %94 = vector.shape_cast %91 : vector<8x32xf32> to vector<1x8x32xf32>
    tpu.vector_store %arg7[%c0_35, %c0_36, %c0_37], %94 {strides = array<i32>} : memref<1x8x32xf32, #tpu.memory_space<vmem>>, vector<1x8x32xf32>,
    return
  }
  func.func @transform_0(%arg0: i32, %arg1: i32) -> (i32, i32, i32) {
    %c0_i32 = arith.constant 0 : i32
    %c0_i32_0 = arith.constant 0 : i32
    %c0_i32_1 = arith.constant 0 : i32
    return %arg0, %c0_i32, %c0_i32_0 : i32, i32, i32
  }
  func.func @transform_1(%arg0: i32, %arg1: i32) -> (i32, i32) {
    %c0_i32 = arith.constant 0 : i32
    %c0_i32_0 = arith.constant 0 : i32
    %c0_i32_1 = arith.constant 0 : i32
    return %c0_i32, %c0_i32_0 : i32, i32
  }
  func.func @transform_2(%arg0: i32, %arg1: i32) -> (i32, i32) {
    %c0_i32 = arith.constant 0 : i32
    %c0_i32_0 = arith.constant 0 : i32
    %c0_i32_1 = arith.constant 0 : i32
    return %c0_i32, %c0_i32_0 : i32, i32
  }
  func.func @transform_3(%arg0: i32, %arg1: i32) -> (i32, i32) {
    %c0_i32 = arith.constant 0 : i32
    %c0_i32_0 = arith.constant 0 : i32
    %c0_i32_1 = arith.constant 0 : i32
    return %c0_i32, %c0_i32_0 : i32, i32
  }
  func.func @transform_4(%arg0: i32, %arg1: i32) -> (i32, i32) {
    %c0_i32 = arith.constant 0 : i32
    %c0_i32_0 = arith.constant 0 : i32
    %c0_i32_1 = arith.constant 0 : i32
    return %c0_i32, %c0_i32_0 : i32, i32
  }
  func.func @transform_5(%arg0: i32, %arg1: i32) -> (i32, i32, i32) {
    %c0_i32 = arith.constant 0 : i32
    %c0_i32_0 = arith.constant 0 : i32
    return %arg0, %arg1, %c0_i32 : i32, i32, i32
  }
}

</mosaic_0001>

<llo_original>
// kernel: tpu_custom_call.1
$region0: #{tpu_custom_call.1}
  #allocation0 [shape = 'u32[]', space=smem, size = 0x4, offset = 0x4, fixed_abs, tag = 'smem constant byte address 0x4 - core index']
  #allocation1 [shape = 'u32[144,128]{1,0:T(1,128)}', space=vmem, size = 0x12000, scoped, tag = 'internal scratch']
  #allocation2 [shape = 'bf16[8,64]{1,0:T(8,128)(2,1)}', space=vmem, size = 0x800, scoped, tag = 'scratch operand']
  #allocation3 [shape = 'bf16[8,32]{1,0:T(8,128)(2,1)}', space=vmem, size = 0x800, scoped, tag = 'scratch operand']
  %s0 = inlined_call_operand.hbm [shape: f32[2,8,32], index: 0, kind: input, shape index: {}]
  %s1 = inlined_call_operand.hbm [shape: bf16[32,32], index: 1, kind: input, shape index: {}]
  %s2 = inlined_call_operand.hbm [shape: bf16[32,64], index: 2, kind: input, shape index: {}]
  %s3 = inlined_call_operand.hbm [shape: bf16[32,32], index: 3, kind: input, shape index: {}]
  %s4 = inlined_call_operand.vmem [shape: f32[1,32], index: 4, kind: input, shape index: {}]
  %s5 = inlined_call_operand.hbm [shape: f32[2,8,32], index: 5, kind: output, shape index: {}]
  %s6 = sld [smem:[#allocation0]]
  $region73: #{tpu_custom_call.1} parent=0
    _
  %s8 = ssub.s32 1, %s6
  %s9 = scalar_select 0, %s8, %s6
  $region1: #{tpu_custom_call.1} parent=0
    #allocation4 [shape = 'u8[8192]{0}', space=vmem, size = 0x2000, scoped, tag = 'input window, operand 0']
    #allocation5 [shape = 's32[2]{0}', space=sflag, size = 0x8, scoped, tag = 'scoped memory for tpu_custom_call.1']
    #allocation6 [shape = 's32[2]{0}', space=sflag, size = 0x8, scoped, tag = 'scoped memory for tpu_custom_call.1']
    #allocation7 [shape = 'u8[8192]{0}', space=vmem, size = 0x2000, scoped, tag = 'input window, operand 1, single buffered']
    #allocation8 [shape = 's32[1]{0}', space=sflag, size = 0x4, scoped, tag = 'scoped memory for tpu_custom_call.1']
    #allocation9 [shape = 'u8[8192]{0}', space=vmem, size = 0x2000, scoped, tag = 'input window, operand 2, single buffered']
    #allocation10 [shape = 'u8[8192]{0}', space=vmem, size = 0x2000, scoped, tag = 'input window, operand 3, single buffered']
    #allocation11 [shape = 's32[1]{0}', space=sflag, size = 0x4, scoped, tag = 'scoped memory for tpu_custom_call.1']
    #allocation12 [shape = 'u8[8192]{0}', space=vmem, size = 0x2000, scoped, tag = 'output window, operand 0']
    %10 = vsyncpa [#allocation5], 0
    %s11 = scalar_lea.sflag [#allocation5], 1
    %12 = vsyncpa %s11, 0
    %13 = vsyncpa [#allocation8], 0
    %14 = vsyncpa [#allocation11], 0
    %15 = vsyncpa [#allocation6], 0
    %s16 = scalar_lea.sflag [#allocation6], 1
    %17 = vsyncpa %s16, 0
    loop: start=0, step=1, limit=4
    $region2: #{tpu_custom_call.1} parent=1 // loop_pre_header
      _
    $region3: #{tpu_custom_call.1} parent=1 // loop_header
      %s19 = sphi 0, %s23
      %p20 = scmp.ge.s32.totalorder %s19, 4
      %s26 = sphi 0, %s38
      %s27 = sphi 0, %s34
      %s28 = sphi 0, %s26
      %s29 = sphi 0, %s27
      %s30 = sphi 0, %s28
      %s31 = sphi 0, %s29
      %s41 = sphi 0, %s43
      %s44 = sphi 0, %s41
      %s45 = sphi 0, %s44
      %s61 = sphi 0, %s45
      %s65 = sphi 0, %s65
      %s67 = sphi 0, %s65
      %s68 = sphi 0, %s67
      %s82 = sphi 0, %s68
      %s86 = sphi 0, %s86
      %s88 = sphi 0, %s86
      %s89 = sphi 0, %s88
      %s103 = sphi 0, %s89
      %s107 = sphi 0, %s107
      %s109 = sphi 0, %s107
      %s110 = sphi 0, %s109
      %s124 = sphi 0, %s110
      %s128 = sphi 0, %s128
      %s130 = sphi 0, %s128
      %s131 = sphi 0, %s130
      %s145 = sphi 0, %s131
      %s153 = sphi 0, %s155
      %s156 = sphi 0, %s153
      %s157 = sphi 0, %s156
      %s173 = sphi 0, %s157
    $region4: #{tpu_custom_call.1} parent=1 // loop_header_branch
      %22 = sbr.rel (%p20) target = $region8
    $region5: #{tpu_custom_call.1} parent=1 // loop_body
      %s24 = ssub.s32 %s19, 1
      %s25 = ssub.s32 %s19, 2
      %s32 = sadd.s32 1, %s27
      %p33 = scmp.ge.s32.totalorder %s32, 1
      %s34 = scalar_select %p33, 0, %s32
      %s35 = sadd.s32 1, %s26
      %s36 = scalar_select %p33, %s35, %s26
      %p37 = scmp.ge.s32.totalorder %s36, 2
      %s38 = scalar_select %p37, 0, %s36
      %s39 = ssub.s32 %s26, %s38
      %p40 = scmp.eq.s32.totalorder %s39, 0
      %s42 = sadd.s32 %s41, 1
      %s43 = scalar_select %p40, %s41, %s42
      %p46 = pneg %p40
      %p47 = scmp.eq.s32.totalorder %s19, 1
      %p48 = por %p46, %p47
      %p49 = scmp.ne.s32.totalorder %s41, %s44
      %p50 = scmp.eq.s32.totalorder %s19, 0
      %p51 = por %p49, %p50
      %p52 = scmp.ne.s32.totalorder %s41, %s44
      %p53 = scmp.eq.s32.totalorder %s24, 1
      %p54 = por %p52, %p53
      %p55 = scmp.ne.s32.totalorder %s44, %s45
      %p56 = scmp.eq.s32.totalorder %s24, 0
      %p57 = por %p55, %p56
      %p58 = scmp.ne.s32.totalorder %s44, %s45
      %p59 = scmp.eq.s32.totalorder %s25, 1
      %p60 = por %p58, %p59
      %p62 = scmp.ne.s32.totalorder %s45, %s61
      %p63 = scmp.eq.s32.totalorder %s25, 0
      %p64 = por %p62, %p63
      %s66 = sadd.s32 %s65, 1
      %p69 = scmp.eq.s32.totalorder %s19, 1
      %p70 = scmp.ne.s32.totalorder %s65, %s67
      %p71 = scmp.eq.s32.totalorder %s19, 0
      %p72 = por %p70, %p71
      %p73 = scmp.ne.s32.totalorder %s65, %s67
      %p74 = scmp.eq.s32.totalorder %s24, 1
      %p75 = por %p73, %p74
      %p76 = scmp.ne.s32.totalorder %s67, %s68
      %p77 = scmp.eq.s32.totalorder %s24, 0
      %p78 = por %p76, %p77
      %p79 = scmp.ne.s32.totalorder %s67, %s68
      %p80 = scmp.eq.s32.totalorder %s25, 1
      %p81 = por %p79, %p80
      %p83 = scmp.ne.s32.totalorder %s68, %s82
      %p84 = scmp.eq.s32.totalorder %s25, 0
      %p85 = por %p83, %p84
      %s87 = sadd.s32 %s86, 1
      %p90 = scmp.eq.s32.totalorder %s19, 1
      %p91 = scmp.ne.s32.totalorder %s86, %s88
      %p92 = scmp.eq.s32.totalorder %s19, 0
      %p93 = por %p91, %p92
      %p94 = scmp.ne.s32.totalorder %s86, %s88
      %p95 = scmp.eq.s32.totalorder %s24, 1
      %p96 = por %p94, %p95
      %p97 = scmp.ne.s32.totalorder %s88, %s89
      %p98 = scmp.eq.s32.totalorder %s24, 0
      %p99 = por %p97, %p98
      %p100 = scmp.ne.s32.totalorder %s88, %s89
      %p101 = scmp.eq.s32.totalorder %s25, 1
      %p102 = por %p100, %p101
      %p104 = scmp.ne.s32.totalorder %s89, %s103
      %p105 = scmp.eq.s32.totalorder %s25, 0
      %p106 = por %p104, %p105
      %s108 = sadd.s32 %s107, 1
      %p111 = scmp.eq.s32.totalorder %s19, 1
      %p112 = scmp.ne.s32.totalorder %s107, %s109
      %p113 = scmp.eq.s32.totalorder %s19, 0
      %p114 = por %p112, %p113
      %p115 = scmp.ne.s32.totalorder %s107, %s109
      %p116 = scmp.eq.s32.totalorder %s24, 1
      %p117 = por %p115, %p116
      %p118 = scmp.ne.s32.totalorder %s109, %s110
      %p119 = scmp.eq.s32.totalorder %s24, 0
      %p120 = por %p118, %p119
      %p121 = scmp.ne.s32.totalorder %s109, %s110
      %p122 = scmp.eq.s32.totalorder %s25, 1
      %p123 = por %p121, %p122
      %p125 = scmp.ne.s32.totalorder %s110, %s124
      %p126 = scmp.eq.s32.totalorder %s25, 0
      %p127 = por %p125, %p126
      %s129 = sadd.s32 %s128, 1
      %p132 = scmp.eq.s32.totalorder %s19, 1
      %p133 = scmp.ne.s32.totalorder %s128, %s130
      %p134 = scmp.eq.s32.totalorder %s19, 0
      %p135 = por %p133, %p134
      %p136 = scmp.ne.s32.totalorder %s128, %s130
      %p137 = scmp.eq.s32.totalorder %s24, 1
      %p138 = por %p136, %p137
      %p139 = scmp.ne.s32.totalorder %s130, %s131
      %p140 = scmp.eq.s32.totalorder %s24, 0
      %p141 = por %p139, %p140
      %p142 = scmp.ne.s32.totalorder %s130, %s131
      %p143 = scmp.eq.s32.totalorder %s25, 1
      %p144 = por %p142, %p143
      %p146 = scmp.ne.s32.totalorder %s131, %s145
      %p147 = scmp.eq.s32.totalorder %s25, 0
      %p148 = por %p146, %p147
      %s149 = ssub.s32 %s26, %s38
      %s150 = ssub.s32 %s27, %s34
      %s151 = sor.u32 %s149, %s150
      %p152 = scmp.eq.s32.totalorder %s151, 0
      %s154 = sadd.s32 %s153, 1
      %s155 = scalar_select %p152, %s153, %s154
      %p158 = pneg %p152
      %p159 = scmp.eq.s32.totalorder %s19, 1
      %p160 = por %p158, %p159
      %p161 = scmp.ne.s32.totalorder %s153, %s156
      %p162 = scmp.eq.s32.totalorder %s19, 0
      %p163 = por %p161, %p162
      %p164 = scmp.ne.s32.totalorder %s153, %s156
      %p165 = scmp.eq.s32.totalorder %s24, 1
      %p166 = por %p164, %p165
      %p167 = scmp.ne.s32.totalorder %s156, %s157
      %p168 = scmp.eq.s32.totalorder %s24, 0
      %p169 = por %p167, %p168
      %p170 = scmp.ne.s32.totalorder %s156, %s157
      %p171 = scmp.eq.s32.totalorder %s25, 1
      %p172 = por %p170, %p171
      %p174 = scmp.ne.s32.totalorder %s157, %s173
      %p175 = scmp.eq.s32.totalorder %s25, 0
      %p176 = por %p174, %p175
      %p177 = scmp.le.s32.totalorder 1, %s19
      %p178 = scmp.lt.s32.totalorder %s19, 3
      %p179 = pnand %p177, %p178
      %p180 = pneg %p179
      // Predicated region
      $region9: #{tpu_custom_call.1} parent=5 // pred_check
        _
      $region10: #{tpu_custom_call.1} parent=5 // pred_check_branch
        %182 = sbr.rel (%p179) target = $region12
      $region11: #{tpu_custom_call.1} parent=5 // pred_region
        %s183 = ssub.s32 %s19, 1
        // Predicated region
        $region13: #{tpu_custom_call.1} parent=11 // pred_check
          %p184 = pneg %p78
        $region14: #{tpu_custom_call.1} parent=11 // pred_check_branch
          %186 = sbr.rel (%p184) target = $region16
        $region15: #{tpu_custom_call.1} parent=11 // pred_region
          %s188 = ssub.s32 256, 256
          %189 = vsyncadd [#allocation8], %s188
          %s190 = sshll.u32 [#allocation7], 4
          %s191 = int_to_ptr.vmem [resolvable:$true] %s190
          %196 = dma.hbm_to_vmem [thread:$0]  %s1, 256, %s191, [#allocation8], 64, 64, 4
        $region16: #{tpu_custom_call.1} parent=11 // pred_fallthru
          _
        // Predicated region
        $region17: #{tpu_custom_call.1} parent=11 // pred_check
          %p197 = pneg %p99
        $region18: #{tpu_custom_call.1} parent=11 // pred_check_branch
          %199 = sbr.rel (%p197) target = $region20
        $region19: #{tpu_custom_call.1} parent=11 // pred_region
          %s201 = ssub.s32 256, 256
          %202 = vsyncadd [#allocation8], %s201
          %s203 = sshll.u32 [#allocation9], 4
          %s204 = int_to_ptr.vmem [resolvable:$true] %s203
          %209 = dma.hbm_to_vmem [thread:$0]  %s2, 256, %s204, [#allocation8], 64, 64, 4
        $region20: #{tpu_custom_call.1} parent=11 // pred_fallthru
          _
        // Predicated region
        $region21: #{tpu_custom_call.1} parent=11 // pred_check
          %p210 = pneg %p120
        $region22: #{tpu_custom_call.1} parent=11 // pred_check_branch
          %212 = sbr.rel (%p210) target = $region24
        $region23: #{tpu_custom_call.1} parent=11 // pred_region
          %s214 = ssub.s32 256, 256
          %215 = vsyncadd [#allocation11], %s214
          %s216 = sshll.u32 [#allocation10], 4
          %s217 = int_to_ptr.vmem [resolvable:$true] %s216
          %222 = dma.hbm_to_vmem [thread:$0]  %s3, 256, %s217, [#allocation11], 64, 64, 4
        $region24: #{tpu_custom_call.1} parent=11 // pred_fallthru
          _
        // Predicated region
        $region25: #{tpu_custom_call.1} parent=11 // pred_check
          %p223 = pneg %p141
        $region26: #{tpu_custom_call.1} parent=11 // pred_check_branch
          %225 = sbr.rel (%p223) target = $region28
        $region27: #{tpu_custom_call.1} parent=11 // pred_region
          _
        $region28: #{tpu_custom_call.1} parent=11 // pred_fallthru
          _
      $region12: #{tpu_custom_call.1} parent=5 // pred_fallthru
        _
      %p226 = scmp.lt.s32.totalorder %s19, 2
      // Predicated region
      $region29: #{tpu_custom_call.1} parent=5 // pred_check
        %p227 = pneg %p226
      $region30: #{tpu_custom_call.1} parent=5 // pred_check_branch
        %229 = sbr.rel (%p227) target = $region32
      $region31: #{tpu_custom_call.1} parent=5 // pred_region
        // Predicated region
        $region33: #{tpu_custom_call.1} parent=31 // pred_check
          %p230 = pneg %p51
        $region34: #{tpu_custom_call.1} parent=31 // pred_check_branch
          %232 = sbr.rel (%p230) target = $region36
        $region35: #{tpu_custom_call.1} parent=31 // pred_region
          %s233 = sand.u32 %s41, 1
          %s234 = scalar_lea.sflag [#allocation5], %s233
          %s235 = sand.u32 %s41, 1
          %s236 = smul.addr %s235, 8
          %s237 = scalar_lea.vmem [#allocation4], %s236
          %s239 = ssub.s32 128, 128
          %240 = vsyncadd %s234, %s239
          %s241 = smul.addr %s26, 128
          %s242 = scalar_lea.hbm %s0, %s241
          %s244 = sshll.u32 %s237, 4
          %s245 = int_to_ptr.vmem [resolvable:$true] %s244
          %247 = dma.hbm_to_vmem [thread:$0]  %s242, 128, %s245, %s234
        $region36: #{tpu_custom_call.1} parent=31 // pred_fallthru
          _
      $region32: #{tpu_custom_call.1} parent=5 // pred_fallthru
        _
      %p248 = scmp.le.s32.totalorder 1, %s19
      %p249 = scmp.lt.s32.totalorder %s19, 3
      %p250 = pnand %p248, %p249
      %p251 = pneg %p250
      // Predicated region
      $region37: #{tpu_custom_call.1} parent=5 // pred_check
        _
      $region38: #{tpu_custom_call.1} parent=5 // pred_check_branch
        %253 = sbr.rel (%p250) target = $region40
      $region39: #{tpu_custom_call.1} parent=5 // pred_region
        %s254 = ssub.s32 %s19, 1
        %s255 = sand.u32 %s44, 1
        %s256 = scalar_lea.sflag [#allocation5], %s255
        %s257 = sand.u32 %s44, 1
        %s258 = smul.addr %s257, 8
        %s259 = scalar_lea.vmem [#allocation4], %s258
        // Predicated region
        $region41: #{tpu_custom_call.1} parent=39 // pred_check
          %p260 = pneg %p57
        $region42: #{tpu_custom_call.1} parent=39 // pred_check_branch
          %262 = sbr.rel (%p260) target = $region44
        $region43: #{tpu_custom_call.1} parent=39 // pred_region
          %263 = dma.done %s256, 128
        $region44: #{tpu_custom_call.1} parent=39 // pred_fallthru
          _
        // Predicated region
        $region45: #{tpu_custom_call.1} parent=39 // pred_check
          %p264 = pneg %p78
        $region46: #{tpu_custom_call.1} parent=39 // pred_check_branch
          %266 = sbr.rel (%p264) target = $region48
        $region47: #{tpu_custom_call.1} parent=39 // pred_region
          %267 = dma.done [#allocation8], 256
        $region48: #{tpu_custom_call.1} parent=39 // pred_fallthru
          _
        // Predicated region
        $region49: #{tpu_custom_call.1} parent=39 // pred_check
          %p268 = pneg %p99
        $region50: #{tpu_custom_call.1} parent=39 // pred_check_branch
          %270 = sbr.rel (%p268) target = $region52
        $region51: #{tpu_custom_call.1} parent=39 // pred_region
          %271 = dma.done [#allocation8], 256
        $region52: #{tpu_custom_call.1} parent=39 // pred_fallthru
          _
        // Predicated region
        $region53: #{tpu_custom_call.1} parent=39 // pred_check
          %p272 = pneg %p120
        $region54: #{tpu_custom_call.1} parent=39 // pred_check_branch
          %274 = sbr.rel (%p272) target = $region56
        $region55: #{tpu_custom_call.1} parent=39 // pred_region
          %275 = dma.done [#allocation11], 256
        $region56: #{tpu_custom_call.1} parent=39 // pred_fallthru
          _
        %s276 = sand.u32 %s44, 1
        %s277 = scalar_lea.sflag [#allocation5], %s276
        %s278 = sand.u32 %s44, 1
        %s279 = smul.addr %s278, 8
        %s280 = scalar_lea.vmem [#allocation4], %s279
        %p281 = pneg %p57
        %p282 = pneg %p54
        %p283 = pneg %p78
        %p284 = pneg %p75
        %p285 = pneg %p99
        %p286 = pneg %p96
        %p287 = pneg %p120
        %p288 = pneg %p117
        %p289 = pneg %p141
        %p290 = pneg %p138
        %p291 = pneg %p169
        %p292 = pneg %p166
        %s293 = sand.u32 %s156, 1
        %s294 = scalar_lea.sflag [#allocation6], %s293
        %s295 = sand.u32 %s156, 1
        %s296 = smul.addr %s295, 8
        %s297 = scalar_lea.vmem [#allocation12], %s296
        %p299 = scmp.eq.s32.totalorder %s29, 0
        // Predicated region
        $region57: #{tpu_custom_call.1} parent=39 // pred_check
          %p300 = pneg %p299
        $region58: #{tpu_custom_call.1} parent=39 // pred_check_branch
          %302 = sbr.rel (%p300) target = $region60
        $region59: #{tpu_custom_call.1} parent=39 // pred_region
          %v303 = vld [vmem:[%s259] sm:$0xff]
          %v304 = vpack.c.bf16 %v303, %v303
          %v305 = vld [vmem:[#allocation9] sm:$0xf]
          %v306 = vld [vmem:[#allocation9 + $0x4] sm:$0xf]
          %v307 = vld [vmem:[#allocation9 + $0x8] sm:$0xf]
          %v308 = vld [vmem:[#allocation9 + $0xc] sm:$0xf]
          %v313 = vunpack.c.l.b16 %v305
          %v314 = vunpack.c.l.b16 %v306
          %v315 = vunpack.c.l.b16 %v307
          %v316 = vunpack.c.l.b16 %v308
          %v317 = vpack.c.b16 %v314, %v313
          %v318 = vpack.c.b16 %v316, %v315
          %vm321 = vcmask 261120
          %v323 = vsel %vm321, %v304, 0
          %325 = vmatprep.subr.bf16.mxu0 0
          %326 = vmatpush1.bf16.msra.mxu0 0
          %327 = vmatprep.subr.bf16.mxu0 0
          %328 = vmatpush1.bf16.msra.mxu0 0
          %329 = vmatprep.subr.bf16.mxu0 0
          %330 = vmatpush1.bf16.msra.mxu0 0
          %331 = vmatprep.subr.bf16.mxu0 0
          %332 = vmatpush1.bf16.msra.mxu0 0
          %333 = vmatprep.subr.bf16.mxu0 0
          %334 = vmatpush1.bf16.msra.mxu0 0
          %335 = vmatprep.subr.bf16.mxu0 0
          %336 = vmatpush1.bf16.msra.mxu0 0
          %337 = vmatprep.subr.bf16.mxu0 0
          %338 = vmatpush1.bf16.msra.mxu0 %v318
          %339 = vmatprep.subr.bf16.mxu0 0
          %340 = vmatpush1.bf16.msra.mxu0 %v317
          %341 = vmatprep.subr.bf16.mxu0 0
          %342 = vmatpush2.bf16.msra.mxu0 0
          %343 = vmatprep.subr.bf16.mxu0 0
          %344 = vmatpush2.bf16.msra.mxu0 0
          %345 = vmatprep.subr.bf16.mxu0 0
          %346 = vmatpush2.bf16.msra.mxu0 0
          %347 = vmatprep.subr.bf16.mxu0 0
          %348 = vmatpush2.bf16.msra.mxu0 0
          %349 = vmatprep.subr.bf16.mxu0 0
          %350 = vmatpush2.bf16.msra.mxu0 0
          %351 = vmatprep.subr.bf16.mxu0 0
          %352 = vmatpush2.bf16.msra.mxu0 0
          %353 = vmatprep.subr.bf16.mxu0 0
          %354 = vmatpush2.bf16.msra.mxu0 0
          %355 = vmatprep.subr.bf16.mxu0 0
          %356 = vmatpush2.bf16.msra.mxu0 0
          %357 = vmatprep.mubr.bf16.mxu0 0
          %358 = vmatmul.mubr.bf16.gmra.mxu0 %v323
          %v359 = vpop.f32.mrf.mxu0
          %v360 = vadd.f32 0.0, %v359
          %v361 = vpop.f32.mrf.mxu0
          %v362 = vpop.f32.mrf.mxu0
          %v363 = vpop.f32.mrf.mxu0
          %364 = vdwg.mxu0
          %v365 = vpack.c.bf16 %v360, %v360
          %vm366 = vcmask 519168
          %367 = vst.msk [vmem:[#allocation2] sm:$0xf] %vm366, %v365
        $region60: #{tpu_custom_call.1} parent=39 // pred_fallthru
          _
        %s368 = smul.u32 %s29, 8
        %s369 = scalar_lea.vmem %s259, %s368 [#allocation4]
        %v370 = vld [vmem:[%s369] sm:$0xff]
        %v371 = vpack.c.bf16 %v370, %v370
        %v372 = vld [vmem:[#allocation7] sm:$0xf]
        %v373 = vld [vmem:[#allocation7 + $0x4] sm:$0xf]
        %v374 = vld [vmem:[#allocation7 + $0x8] sm:$0xf]
        %v375 = vld [vmem:[#allocation7 + $0xc] sm:$0xf]
        %v380 = vunpack.c.l.b16 %v372
        %v381 = vunpack.c.l.b16 %v373
        %v382 = vunpack.c.l.b16 %v374
        %v383 = vunpack.c.l.b16 %v375
        %v384 = vpack.c.b16 %v381, %v380
        %v385 = vpack.c.b16 %v383, %v382
        %vm388 = vcmask 261120
        %v390 = vsel %vm388, %v371, 0
        %392 = vmatprep.subr.bf16.mxu0 0
        %393 = vmatpush1.bf16.msra.mxu0 0
        %394 = vmatprep.subr.bf16.mxu0 0
        %395 = vmatpush1.bf16.msra.mxu0 0
        %396 = vmatprep.subr.bf16.mxu0 0
        %397 = vmatpush1.bf16.msra.mxu0 0
        %398 = vmatprep.subr.bf16.mxu0 0
        %399 = vmatpush1.bf16.msra.mxu0 0
        %400 = vmatprep.subr.bf16.mxu0 0
        %401 = vmatpush1.bf16.msra.mxu0 0
        %402 = vmatprep.subr.bf16.mxu0 0
        %403 = vmatpush1.bf16.msra.mxu0 0
        %404 = vmatprep.subr.bf16.mxu0 0
        %405 = vmatpush1.bf16.msra.mxu0 %v385
        %406 = vmatprep.subr.bf16.mxu0 0
        %407 = vmatpush1.bf16.msra.mxu0 %v384
        %408 = vmatprep.subr.bf16.mxu0 0
        %409 = vmatpush2.bf16.msra.mxu0 0
        %410 = vmatprep.subr.bf16.mxu0 0
        %411 = vmatpush2.bf16.msra.mxu0 0
        %412 = vmatprep.subr.bf16.mxu0 0
        %413 = vmatpush2.bf16.msra.mxu0 0
        %414 = vmatprep.subr.bf16.mxu0 0
        %415 = vmatpush2.bf16.msra.mxu0 0
        %416 = vmatprep.subr.bf16.mxu0 0
        %417 = vmatpush2.bf16.msra.mxu0 0
        %418 = vmatprep.subr.bf16.mxu0 0
        %419 = vmatpush2.bf16.msra.mxu0 0
        %420 = vmatprep.subr.bf16.mxu0 0
        %421 = vmatpush2.bf16.msra.mxu0 0
        %422 = vmatprep.subr.bf16.mxu0 0
        %423 = vmatpush2.bf16.msra.mxu0 0
        %424 = vmatprep.mubr.bf16.mxu0 0
        %425 = vmatmul.mubr.bf16.gmra.mxu0 %v390
        %v426 = vpop.f32.mrf.mxu0
        %v427 = vadd.f32 0.0, %v426
        %v428 = vpop.f32.mrf.mxu0
        %v429 = vpop.f32.mrf.mxu0
        %v430 = vpop.f32.mrf.mxu0
        %431 = vdwg.mxu0
        %v432 = vpack.c.bf16 %v427, %v427
        %v433 = vld [vmem:[#allocation2] sm:$0xf]
        %vm434 = vcmask 64512
        %v436 = vsel %vm434, %v432, 0
        %v439 = vsel %vm434, %v433, 0
        %441 = vmatprep.subr.bf16.mxu0 0
        %442 = vmatpush1.bf16.xpose.msra.mxu0 0
        %443 = vmatprep.subr.bf16.mxu0 0
        %444 = vmatpush1.bf16.xpose.msra.mxu0 0
        %445 = vmatprep.subr.bf16.mxu0 0
        %446 = vmatpush1.bf16.xpose.msra.mxu0 0
        %447 = vmatprep.subr.bf16.mxu0 0
        %448 = vmatpush1.bf16.xpose.msra.mxu0 0
        %449 = vmatprep.subr.bf16.mxu0 0
        %450 = vmatpush1.bf16.xpose.msra.mxu0 0
        %451 = vmatprep.subr.bf16.mxu0 0
        %452 = vmatpush1.bf16.xpose.msra.mxu0 0
        %453 = vmatprep.subr.bf16.mxu0 0
        %454 = vmatpush1.bf16.xpose.msra.mxu0 0
        %455 = vmatprep.subr.bf16.mxu0 0
        %456 = vmatpush1.bf16.xpose.msra.mxu0 %v439
        %457 = vmatprep.subr.bf16.mxu0 0
        %458 = vmatpush2.bf16.xpose.msra.mxu0 0
        %459 = vmatprep.subr.bf16.mxu0 0
        %460 = vmatpush2.bf16.xpose.msra.mxu0 0
        %461 = vmatprep.subr.bf16.mxu0 0
        %462 = vmatpush2.bf16.xpose.msra.mxu0 0
        %463 = vmatprep.subr.bf16.mxu0 0
        %464 = vmatpush2.bf16.xpose.msra.mxu0 0
        %465 = vmatprep.subr.bf16.mxu0 0
        %466 = vmatpush2.bf16.xpose.msra.mxu0 0
        %467 = vmatprep.subr.bf16.mxu0 0
        %468 = vmatpush2.bf16.xpose.msra.mxu0 0
        %469 = vmatprep.subr.bf16.mxu0 0
        %470 = vmatpush2.bf16.xpose.msra.mxu0 0
        %471 = vmatprep.subr.bf16.mxu0 0
        %472 = vmatpush2.bf16.xpose.msra.mxu0 0
        %473 = vmatprep.mubr.bf16.mxu0 0
        %474 = vmatmul.mubr.bf16.gmra.mxu0 %v436
        %v475 = vpop.f32.mrf.mxu0
        %v476 = vadd.f32 0.0, %v475
        %v477 = vpop.f32.mrf.mxu0
        %v478 = vpop.f32.mrf.mxu0
        %v479 = vpop.f32.mrf.mxu0
        %480 = vdwg.mxu0
        %v481 = vsel %vm434, %v476, -inf
        %482 = vmax.xlane.f32.xlu0 %v481
        %v483 = vpop.xlane.xlu0 %482
        %v484 = vsub.f32 %v476, %v483
        %v485 = vmul.f32 %v484, 1.442695
        %v486 = vpow.pop %v485
        %v487 = vsel %vm434, %v486, 0.0
        %488 = vadd.xlane.f32.xlu0 %v487
        %v489 = vpop.xlane.xlu0 %488
        %v490 = vpack.c.bf16 %v486, %v486
        %v492 = vunpack.c.l.b16 %v433
        %v493 = vpack.c.b16 %v492, %v492
        %494 = vrot.lane.b32.xlu0 %v493, 96
        %v495 = vpop.permute.xlu0 %494
        %v497 = vsel %vm434, %v490, 0
        %vm499 = vcmask 1043456
        %v501 = vsel %vm499, %v495, 0
        %503 = vmatprep.subr.bf16.mxu0 0
        %504 = vmatpush1.bf16.msra.mxu0 0
        %505 = vmatprep.subr.bf16.mxu0 0
        %506 = vmatpush1.bf16.msra.mxu0 0
        %507 = vmatprep.subr.bf16.mxu0 0
        %508 = vmatpush1.bf16.msra.mxu0 0
        %509 = vmatprep.subr.bf16.mxu0 0
        %510 = vmatpush1.bf16.msra.mxu0 0
        %511 = vmatprep.subr.bf16.mxu0 0
        %512 = vmatpush1.bf16.msra.mxu0 0
        %513 = vmatprep.subr.bf16.mxu0 0
        %514 = vmatpush1.bf16.msra.mxu0 0
        %515 = vmatprep.subr.bf16.mxu0 0
        %516 = vmatpush1.bf16.msra.mxu0 0
        %517 = vmatprep.subr.bf16.mxu0 0
        %518 = vmatpush1.bf16.msra.mxu0 %v501
        %519 = vmatprep.subr.bf16.mxu0 0
        %520 = vmatpush2.bf16.msra.mxu0 0
        %521 = vmatprep.subr.bf16.mxu0 0
        %522 = vmatpush2.bf16.msra.mxu0 0
        %523 = vmatprep.subr.bf16.mxu0 0
        %524 = vmatpush2.bf16.msra.mxu0 0
        %525 = vmatprep.subr.bf16.mxu0 0
        %526 = vmatpush2.bf16.msra.mxu0 0
        %527 = vmatprep.subr.bf16.mxu0 0
        %528 = vmatpush2.bf16.msra.mxu0 0
        %529 = vmatprep.subr.bf16.mxu0 0
        %530 = vmatpush2.bf16.msra.mxu0 0
        %531 = vmatprep.subr.bf16.mxu0 0
        %532 = vmatpush2.bf16.msra.mxu0 0
        %533 = vmatprep.subr.bf16.mxu0 0
        %534 = vmatpush2.bf16.msra.mxu0 0
        %535 = vmatprep.mubr.bf16.mxu0 0
        %536 = vmatmul.mubr.bf16.gmra.mxu0 %v497
        %v537 = vpop.f32.mrf.mxu0
        %v538 = vadd.f32 0.0, %v537
        %v539 = vpop.f32.mrf.mxu0
        %v540 = vpop.f32.mrf.mxu0
        %v541 = vpop.f32.mrf.mxu0
        %542 = vdwg.mxu0
        %v543 = vrcp.pop %v489
        %v544 = vmul.f32 %v538, %v543
        %v545 = vpack.c.bf16 %v544, %v544
        %vm546 = vcmask 60416
        %547 = vst.msk [vmem:[#allocation3] sm:$0xf] %vm546, %v545
        %549 = vrot.lane.b32.xlu0 %v432, 120
        %v550 = vpop.permute.xlu0 %549
        %551 = vrot.lane.b32.xlu0 %v493, 120
        %v552 = vpop.permute.xlu0 %551
        %v554 = vsel %vm434, %v550, 0
        %v557 = vsel %vm434, %v552, 0
        %559 = vmatprep.subr.bf16.mxu0 0
        %560 = vmatpush1.bf16.xpose.msra.mxu0 0
        %561 = vmatprep.subr.bf16.mxu0 0
        %562 = vmatpush1.bf16.xpose.msra.mxu0 0
        %563 = vmatprep.subr.bf16.mxu0 0
        %564 = vmatpush1.bf16.xpose.msra.mxu0 0
        %565 = vmatprep.subr.bf16.mxu0 0
        %566 = vmatpush1.bf16.xpose.msra.mxu0 0
        %567 = vmatprep.subr.bf16.mxu0 0
        %568 = vmatpush1.bf16.xpose.msra.mxu0 0
        %569 = vmatprep.subr.bf16.mxu0 0
        %570 = vmatpush1.bf16.xpose.msra.mxu0 0
        %571 = vmatprep.subr.bf16.mxu0 0
        %572 = vmatpush1.bf16.xpose.msra.mxu0 0
        %573 = vmatprep.subr.bf16.mxu0 0
        %574 = vmatpush1.bf16.xpose.msra.mxu0 %v557
        %575 = vmatprep.subr.bf16.mxu0 0
        %576 = vmatpush2.bf16.xpose.msra.mxu0 0
        %577 = vmatprep.subr.bf16.mxu0 0
        %578 = vmatpush2.bf16.xpose.msra.mxu0 0
        %579 = vmatprep.subr.bf16.mxu0 0
        %580 = vmatpush2.bf16.xpose.msra.mxu0 0
        %581 = vmatprep.subr.bf16.mxu0 0
        %582 = vmatpush2.bf16.xpose.msra.mxu0 0
        %583 = vmatprep.subr.bf16.mxu0 0
        %584 = vmatpush2.bf16.xpose.msra.mxu0 0
        %585 = vmatprep.subr.bf16.mxu0 0
        %586 = vmatpush2.bf16.xpose.msra.mxu0 0
        %587 = vmatprep.subr.bf16.mxu0 0
        %588 = vmatpush2.bf16.xpose.msra.mxu0 0
        %589 = vmatprep.subr.bf16.mxu0 0
        %590 = vmatpush2.bf16.xpose.msra.mxu0 0
        %591 = vmatprep.mubr.bf16.mxu0 0
        %592 = vmatmul.mubr.bf16.gmra.mxu0 %v554
        %v593 = vpop.f32.mrf.mxu0
        %v594 = vadd.f32 0.0, %v593
        %v595 = vpop.f32.mrf.mxu0
        %v596 = vpop.f32.mrf.mxu0
        %v597 = vpop.f32.mrf.mxu0
        %598 = vdwg.mxu0
        %v599 = vsel %vm434, %v594, -inf
        %600 = vmax.xlane.f32.xlu0 %v599
        %v601 = vpop.xlane.xlu0 %600
        %v602 = vsub.f32 %v594, %v601
        %v603 = vmul.f32 %v602, 1.442695
        %v604 = vpow.pop %v603
        %v605 = vsel %vm434, %v604, 0.0
        %606 = vadd.xlane.f32.xlu0 %v605
        %v607 = vpop.xlane.xlu0 %606
        %v608 = vpack.c.bf16 %v604, %v604
        %609 = vrot.lane.b32.xlu0 %v493, 88
        %v610 = vpop.permute.xlu0 %609
        %v612 = vsel %vm434, %v608, 0
        %v615 = vsel %vm499, %v610, 0
        %617 = vmatprep.subr.bf16.mxu0 0
        %618 = vmatpush1.bf16.msra.mxu0 0
        %619 = vmatprep.subr.bf16.mxu0 0
        %620 = vmatpush1.bf16.msra.mxu0 0
        %621 = vmatprep.subr.bf16.mxu0 0
        %622 = vmatpush1.bf16.msra.mxu0 0
        %623 = vmatprep.subr.bf16.mxu0 0
        %624 = vmatpush1.bf16.msra.mxu0 0
        %625 = vmatprep.subr.bf16.mxu0 0
        %626 = vmatpush1.bf16.msra.mxu0 0
        %627 = vmatprep.subr.bf16.mxu0 0
        %628 = vmatpush1.bf16.msra.mxu0 0
        %629 = vmatprep.subr.bf16.mxu0 0
        %630 = vmatpush1.bf16.msra.mxu0 0
        %631 = vmatprep.subr.bf16.mxu0 0
        %632 = vmatpush1.bf16.msra.mxu0 %v615
        %633 = vmatprep.subr.bf16.mxu0 0
        %634 = vmatpush2.bf16.msra.mxu0 0
        %635 = vmatprep.subr.bf16.mxu0 0
        %636 = vmatpush2.bf16.msra.mxu0 0
        %637 = vmatprep.subr.bf16.mxu0 0
        %638 = vmatpush2.bf16.msra.mxu0 0
        %639 = vmatprep.subr.bf16.mxu0 0
        %640 = vmatpush2.bf16.msra.mxu0 0
        %641 = vmatprep.subr.bf16.mxu0 0
        %642 = vmatpush2.bf16.msra.mxu0 0
        %643 = vmatprep.subr.bf16.mxu0 0
        %644 = vmatpush2.bf16.msra.mxu0 0
        %645 = vmatprep.subr.bf16.mxu0 0
        %646 = vmatpush2.bf16.msra.mxu0 0
        %647 = vmatprep.subr.bf16.mxu0 0
        %648 = vmatpush2.bf16.msra.mxu0 0
        %649 = vmatprep.mubr.bf16.mxu0 0
        %650 = vmatmul.mubr.bf16.gmra.mxu0 %v612
        %v651 = vpop.f32.mrf.mxu0
        %v652 = vadd.f32 0.0, %v651
        %v653 = vpop.f32.mrf.mxu0
        %v654 = vpop.f32.mrf.mxu0
        %v655 = vpop.f32.mrf.mxu0
        %656 = vdwg.mxu0
        %v657 = vrcp.pop %v607
        %v658 = vmul.f32 %v652, %v657
        %v659 = vpack.c.bf16 %v658, %v658
        %v661 = vunpack.c.l.b16 %v659
        %v662 = vpack.c.b16 %v661, %v661
        %663 = vrot.lane.b32.xlu0 %v662, 8
        %v664 = vpop.permute.xlu0 %663
        %vm666 = vcmask 126016
        %667 = vst.msk [vmem:[#allocation3] sm:$0xf] %vm666, %v664
        %668 = vrot.lane.b32.xlu0 %v432, 112
        %v669 = vpop.permute.xlu0 %668
        %670 = vrot.lane.b32.xlu0 %v493, 112
        %v671 = vpop.permute.xlu0 %670
        %v673 = vsel %vm434, %v669, 0
        %v676 = vsel %vm434, %v671, 0
        %678 = vmatprep.subr.bf16.mxu0 0
        %679 = vmatpush1.bf16.xpose.msra.mxu0 0
        %680 = vmatprep.subr.bf16.mxu0 0
        %681 = vmatpush1.bf16.xpose.msra.mxu0 0
        %682 = vmatprep.subr.bf16.mxu0 0
        %683 = vmatpush1.bf16.xpose.msra.mxu0 0
        %684 = vmatprep.subr.bf16.mxu0 0
        %685 = vmatpush1.bf16.xpose.msra.mxu0 0
        %686 = vmatprep.subr.bf16.mxu0 0
        %687 = vmatpush1.bf16.xpose.msra.mxu0 0
        %688 = vmatprep.subr.bf16.mxu0 0
        %689 = vmatpush1.bf16.xpose.msra.mxu0 0
        %690 = vmatprep.subr.bf16.mxu0 0
        %691 = vmatpush1.bf16.xpose.msra.mxu0 0
        %692 = vmatprep.subr.bf16.mxu0 0
        %693 = vmatpush1.bf16.xpose.msra.mxu0 %v676
        %694 = vmatprep.subr.bf16.mxu0 0
        %695 = vmatpush2.bf16.xpose.msra.mxu0 0
        %696 = vmatprep.subr.bf16.mxu0 0
        %697 = vmatpush2.bf16.xpose.msra.mxu0 0
        %698 = vmatprep.subr.bf16.mxu0 0
        %699 = vmatpush2.bf16.xpose.msra.mxu0 0
        %700 = vmatprep.subr.bf16.mxu0 0
        %701 = vmatpush2.bf16.xpose.msra.mxu0 0
        %702 = vmatprep.subr.bf16.mxu0 0
        %703 = vmatpush2.bf16.xpose.msra.mxu0 0
        %704 = vmatprep.subr.bf16.mxu0 0
        %705 = vmatpush2.bf16.xpose.msra.mxu0 0
        %706 = vmatprep.subr.bf16.mxu0 0
        %707 = vmatpush2.bf16.xpose.msra.mxu0 0
        %708 = vmatprep.subr.bf16.mxu0 0
        %709 = vmatpush2.bf16.xpose.msra.mxu0 0
        %710 = vmatprep.mubr.bf16.mxu0 0
        %711 = vmatmul.mubr.bf16.gmra.mxu0 %v673
        %v712 = vpop.f32.mrf.mxu0
        %v713 = vadd.f32 0.0, %v712
        %v714 = vpop.f32.mrf.mxu0
        %v715 = vpop.f32.mrf.mxu0
        %v716 = vpop.f32.mrf.mxu0
        %717 = vdwg.mxu0
        %v718 = vsel %vm434, %v713, -inf
        %719 = vmax.xlane.f32.xlu0 %v718
        %v720 = vpop.xlane.xlu0 %719
        %v721 = vsub.f32 %v713, %v720
        %v722 = vmul.f32 %v721, 1.442695
        %v723 = vpow.pop %v722
        %v724 = vsel %vm434, %v723, 0.0
        %725 = vadd.xlane.f32.xlu0 %v724
        %v726 = vpop.xlane.xlu0 %725
        %v727 = vpack.c.bf16 %v723, %v723
        %728 = vrot.lane.b32.xlu0 %v493, 80
        %v729 = vpop.permute.xlu0 %728
        %v731 = vsel %vm434, %v727, 0
        %v734 = vsel %vm499, %v729, 0
        %736 = vmatprep.subr.bf16.mxu0 0
        %737 = vmatpush1.bf16.msra.mxu0 0
        %738 = vmatprep.subr.bf16.mxu0 0
        %739 = vmatpush1.bf16.msra.mxu0 0
        %740 = vmatprep.subr.bf16.mxu0 0
        %741 = vmatpush1.bf16.msra.mxu0 0
        %742 = vmatprep.subr.bf16.mxu0 0
        %743 = vmatpush1.bf16.msra.mxu0 0
        %744 = vmatprep.subr.bf16.mxu0 0
        %745 = vmatpush1.bf16.msra.mxu0 0
        %746 = vmatprep.subr.bf16.mxu0 0
        %747 = vmatpush1.bf16.msra.mxu0 0
        %748 = vmatprep.subr.bf16.mxu0 0
        %749 = vmatpush1.bf16.msra.mxu0 0
        %750 = vmatprep.subr.bf16.mxu0 0
        %751 = vmatpush1.bf16.msra.mxu0 %v734
        %752 = vmatprep.subr.bf16.mxu0 0
        %753 = vmatpush2.bf16.msra.mxu0 0
        %754 = vmatprep.subr.bf16.mxu0 0
        %755 = vmatpush2.bf16.msra.mxu0 0
        %756 = vmatprep.subr.bf16.mxu0 0
        %757 = vmatpush2.bf16.msra.mxu0 0
        %758 = vmatprep.subr.bf16.mxu0 0
        %759 = vmatpush2.bf16.msra.mxu0 0
        %760 = vmatprep.subr.bf16.mxu0 0
        %761 = vmatpush2.bf16.msra.mxu0 0
        %762 = vmatprep.subr.bf16.mxu0 0
        %763 = vmatpush2.bf16.msra.mxu0 0
        %764 = vmatprep.subr.bf16.mxu0 0
        %765 = vmatpush2.bf16.msra.mxu0 0
        %766 = vmatprep.subr.bf16.mxu0 0
        %767 = vmatpush2.bf16.msra.mxu0 0
        %768 = vmatprep.mubr.bf16.mxu0 0
        %769 = vmatmul.mubr.bf16.gmra.mxu0 %v731
        %v770 = vpop.f32.mrf.mxu0
        %v771 = vadd.f32 0.0, %v770
        %v772 = vpop.f32.mrf.mxu0
        %v773 = vpop.f32.mrf.mxu0
        %v774 = vpop.f32.mrf.mxu0
        %775 = vdwg.mxu0
        %v776 = vrcp.pop %v726
        %v777 = vmul.f32 %v771, %v776
        %v778 = vpack.c.bf16 %v777, %v777
        %v780 = vunpack.c.l.b16 %v778
        %v781 = vpack.c.b16 %v780, %v780
        %782 = vrot.lane.b32.xlu0 %v781, 16
        %v783 = vpop.permute.xlu0 %782
        %vm785 = vcmask 191616
        %786 = vst.msk [vmem:[#allocation3] sm:$0xf] %vm785, %v783
        %787 = vrot.lane.b32.xlu0 %v432, 104
        %v788 = vpop.permute.xlu0 %787
        %789 = vrot.lane.b32.xlu0 %v493, 104
        %v790 = vpop.permute.xlu0 %789
        %v792 = vsel %vm434, %v788, 0
        %v795 = vsel %vm434, %v790, 0
        %797 = vmatprep.subr.bf16.mxu0 0
        %798 = vmatpush1.bf16.xpose.msra.mxu0 0
        %799 = vmatprep.subr.bf16.mxu0 0
        %800 = vmatpush1.bf16.xpose.msra.mxu0 0
        %801 = vmatprep.subr.bf16.mxu0 0
        %802 = vmatpush1.bf16.xpose.msra.mxu0 0
        %803 = vmatprep.subr.bf16.mxu0 0
        %804 = vmatpush1.bf16.xpose.msra.mxu0 0
        %805 = vmatprep.subr.bf16.mxu0 0
        %806 = vmatpush1.bf16.xpose.msra.mxu0 0
        %807 = vmatprep.subr.bf16.mxu0 0
        %808 = vmatpush1.bf16.xpose.msra.mxu0 0
        %809 = vmatprep.subr.bf16.mxu0 0
        %810 = vmatpush1.bf16.xpose.msra.mxu0 0
        %811 = vmatprep.subr.bf16.mxu0 0
        %812 = vmatpush1.bf16.xpose.msra.mxu0 %v795
        %813 = vmatprep.subr.bf16.mxu0 0
        %814 = vmatpush2.bf16.xpose.msra.mxu0 0
        %815 = vmatprep.subr.bf16.mxu0 0
        %816 = vmatpush2.bf16.xpose.msra.mxu0 0
        %817 = vmatprep.subr.bf16.mxu0 0
        %818 = vmatpush2.bf16.xpose.msra.mxu0 0
        %819 = vmatprep.subr.bf16.mxu0 0
        %820 = vmatpush2.bf16.xpose.msra.mxu0 0
        %821 = vmatprep.subr.bf16.mxu0 0
        %822 = vmatpush2.bf16.xpose.msra.mxu0 0
        %823 = vmatprep.subr.bf16.mxu0 0
        %824 = vmatpush2.bf16.xpose.msra.mxu0 0
        %825 = vmatprep.subr.bf16.mxu0 0
        %826 = vmatpush2.bf16.xpose.msra.mxu0 0
        %827 = vmatprep.subr.bf16.mxu0 0
        %828 = vmatpush2.bf16.xpose.msra.mxu0 0
        %829 = vmatprep.mubr.bf16.mxu0 0
        %830 = vmatmul.mubr.bf16.gmra.mxu0 %v792
        %v831 = vpop.f32.mrf.mxu0
        %v832 = vadd.f32 0.0, %v831
        %v833 = vpop.f32.mrf.mxu0
        %v834 = vpop.f32.mrf.mxu0
        %v835 = vpop.f32.mrf.mxu0
        %836 = vdwg.mxu0
        %v837 = vsel %vm434, %v832, -inf
        %838 = vmax.xlane.f32.xlu0 %v837
        %v839 = vpop.xlane.xlu0 %838
        %v840 = vsub.f32 %v832, %v839
        %v841 = vmul.f32 %v840, 1.442695
        %v842 = vpow.pop %v841
        %v843 = vsel %vm434, %v842, 0.0
        %844 = vadd.xlane.f32.xlu0 %v843
        %v845 = vpop.xlane.xlu0 %844
        %v846 = vpack.c.bf16 %v842, %v842
        %847 = vrot.lane.b32.xlu0 %v493, 72
        %v848 = vpop.permute.xlu0 %847
        %v850 = vsel %vm434, %v846, 0
        %v853 = vsel %vm499, %v848, 0
        %855 = vmatprep.subr.bf16.mxu0 0
        %856 = vmatpush1.bf16.msra.mxu0 0
        %857 = vmatprep.subr.bf16.mxu0 0
        %858 = vmatpush1.bf16.msra.mxu0 0
        %859 = vmatprep.subr.bf16.mxu0 0
        %860 = vmatpush1.bf16.msra.mxu0 0
        %861 = vmatprep.subr.bf16.mxu0 0
        %862 = vmatpush1.bf16.msra.mxu0 0
        %863 = vmatprep.subr.bf16.mxu0 0
        %864 = vmatpush1.bf16.msra.mxu0 0
        %865 = vmatprep.subr.bf16.mxu0 0
        %866 = vmatpush1.bf16.msra.mxu0 0
        %867 = vmatprep.subr.bf16.mxu0 0
        %868 = vmatpush1.bf16.msra.mxu0 0
        %869 = vmatprep.subr.bf16.mxu0 0
        %870 = vmatpush1.bf16.msra.mxu0 %v853
        %871 = vmatprep.subr.bf16.mxu0 0
        %872 = vmatpush2.bf16.msra.mxu0 0
        %873 = vmatprep.subr.bf16.mxu0 0
        %874 = vmatpush2.bf16.msra.mxu0 0
        %875 = vmatprep.subr.bf16.mxu0 0
        %876 = vmatpush2.bf16.msra.mxu0 0
        %877 = vmatprep.subr.bf16.mxu0 0
        %878 = vmatpush2.bf16.msra.mxu0 0
        %879 = vmatprep.subr.bf16.mxu0 0
        %880 = vmatpush2.bf16.msra.mxu0 0
        %881 = vmatprep.subr.bf16.mxu0 0
        %882 = vmatpush2.bf16.msra.mxu0 0
        %883 = vmatprep.subr.bf16.mxu0 0
        %884 = vmatpush2.bf16.msra.mxu0 0
        %885 = vmatprep.subr.bf16.mxu0 0
        %886 = vmatpush2.bf16.msra.mxu0 0
        %887 = vmatprep.mubr.bf16.mxu0 0
        %888 = vmatmul.mubr.bf16.gmra.mxu0 %v850
        %v889 = vpop.f32.mrf.mxu0
        %v890 = vadd.f32 0.0, %v889
        %v891 = vpop.f32.mrf.mxu0
        %v892 = vpop.f32.mrf.mxu0
        %v893 = vpop.f32.mrf.mxu0
        %894 = vdwg.mxu0
        %v895 = vrcp.pop %v845
        %v896 = vmul.f32 %v890, %v895
        %v897 = vpack.c.bf16 %v896, %v896
        %v899 = vunpack.c.l.b16 %v897
        %v900 = vpack.c.b16 %v899, %v899
        %901 = vrot.lane.b32.xlu0 %v900, 24
        %v902 = vpop.permute.xlu0 %901
        %vm904 = vcmask 257216
        %905 = vst.msk [vmem:[#allocation3] sm:$0xf] %vm904, %v902
        %v906 = vld [vmem:[#allocation3] sm:$0xf]
        %v907 = vld [vmem:[#allocation10] sm:$0xf]
        %v908 = vld [vmem:[#allocation10 + $0x4] sm:$0xf]
        %v909 = vld [vmem:[#allocation10 + $0x8] sm:$0xf]
        %v910 = vld [vmem:[#allocation10 + $0xc] sm:$0xf]
        %v911 = vld [vmem:[%s4] sm:$0x1]
        %v913 = vlaneseq
        %v914 = vshrl.u32 %v913, 7
        %v915 = vsub.s32 0, %v914
        %v916 = vrot.slane %v911, %v915
        %v922 = vunpack.c.l.b16 %v907
        %v923 = vunpack.c.l.b16 %v908
        %v924 = vunpack.c.l.b16 %v909
        %v925 = vunpack.c.l.b16 %v910
        %v926 = vpack.c.b16 %v923, %v922
        %v927 = vpack.c.b16 %v925, %v924
        %v931 = vsel %vm388, %v906, 0
        %933 = vmatprep.subr.bf16.mxu0 0
        %934 = vmatpush1.bf16.msra.mxu0 0
        %935 = vmatprep.subr.bf16.mxu0 0
        %936 = vmatpush1.bf16.msra.mxu0 0
        %937 = vmatprep.subr.bf16.mxu0 0
        %938 = vmatpush1.bf16.msra.mxu0 0
        %939 = vmatprep.subr.bf16.mxu0 0
        %940 = vmatpush1.bf16.msra.mxu0 0
        %941 = vmatprep.subr.bf16.mxu0 0
        %942 = vmatpush1.bf16.msra.mxu0 0
        %943 = vmatprep.subr.bf16.mxu0 0
        %944 = vmatpush1.bf16.msra.mxu0 0
        %945 = vmatprep.subr.bf16.mxu0 0
        %946 = vmatpush1.bf16.msra.mxu0 %v927
        %947 = vmatprep.subr.bf16.mxu0 0
        %948 = vmatpush1.bf16.msra.mxu0 %v926
        %949 = vmatprep.subr.bf16.mxu0 0
        %950 = vmatpush2.bf16.msra.mxu0 0
        %951 = vmatprep.subr.bf16.mxu0 0
        %952 = vmatpush2.bf16.msra.mxu0 0
        %953 = vmatprep.subr.bf16.mxu0 0
        %954 = vmatpush2.bf16.msra.mxu0 0
        %955 = vmatprep.subr.bf16.mxu0 0
        %956 = vmatpush2.bf16.msra.mxu0 0
        %957 = vmatprep.subr.bf16.mxu0 0
        %958 = vmatpush2.bf16.msra.mxu0 0
        %959 = vmatprep.subr.bf16.mxu0 0
        %960 = vmatpush2.bf16.msra.mxu0 0
        %961 = vmatprep.subr.bf16.mxu0 0
        %962 = vmatpush2.bf16.msra.mxu0 0
        %963 = vmatprep.subr.bf16.mxu0 0
        %964 = vmatpush2.bf16.msra.mxu0 0
        %965 = vmatprep.mubr.bf16.mxu0 0
        %966 = vmatmul.mubr.bf16.gmra.mxu0 %v931
        %v967 = vpop.f32.mrf.mxu0
        %v968 = vadd.f32 %v916, %v967
        %v969 = vpop.f32.mrf.mxu0
        %v970 = vpop.f32.mrf.mxu0
        %v971 = vpop.f32.mrf.mxu0
        %972 = vdwg.mxu0
        %973 = vst.msk [vmem:[%s297] sm:$0xff] %vm388, %v968
        %s974 = sand.u32 %s156, 1
        %s975 = scalar_lea.sflag [#allocation6], %s974
        %s976 = sand.u32 %s156, 1
        %s977 = smul.addr %s976, 8
        %s978 = scalar_lea.vmem [#allocation12], %s977
        // Predicated region
        $region61: #{tpu_custom_call.1} parent=39 // pred_check
          %p979 = pneg %p166
        $region62: #{tpu_custom_call.1} parent=39 // pred_check_branch
          %981 = sbr.rel (%p979) target = $region64
        $region63: #{tpu_custom_call.1} parent=39 // pred_region
          %s983 = ssub.s32 128, 128
          %984 = vsyncadd %s975, %s983
          %s985 = sadd.s32 %s29, %s28
          %s986 = smul.addr %s985, 128
          %s987 = scalar_lea.hbm %s5, %s986
          %s989 = sshll.u32 %s978, 4
          %s990 = int_to_ptr.vmem [resolvable:$true] %s989
          %992 = dma.vmem_to_hbm [thread:$0]  %s990, 128, %s987, %s975
        $region64: #{tpu_custom_call.1} parent=39 // pred_fallthru
          _
      $region40: #{tpu_custom_call.1} parent=5 // pred_fallthru
        _
      %p993 = scmp.le.s32.totalorder 2, %s19
      // Predicated region
      $region65: #{tpu_custom_call.1} parent=5 // pred_check
        %p994 = pneg %p993
      $region66: #{tpu_custom_call.1} parent=5 // pred_check_branch
        %996 = sbr.rel (%p994) target = $region68
      $region67: #{tpu_custom_call.1} parent=5 // pred_region
        %s997 = ssub.s32 %s19, 2
        // Predicated region
        $region69: #{tpu_custom_call.1} parent=67 // pred_check
          %p998 = pneg %p172
        $region70: #{tpu_custom_call.1} parent=67 // pred_check_branch
          %1000 = sbr.rel (%p998) target = $region72
        $region71: #{tpu_custom_call.1} parent=67 // pred_region
          %s1001 = sand.u32 %s157, 1
          %s1002 = scalar_lea.sflag [#allocation6], %s1001
          %s1003 = sand.u32 %s157, 1
          %s1004 = smul.addr %s1003, 8
          %s1005 = scalar_lea.vmem [#allocation12], %s1004
          %1006 = dma.done %s1002, 128
        $region72: #{tpu_custom_call.1} parent=67 // pred_fallthru
          _
      $region68: #{tpu_custom_call.1} parent=5 // pred_fallthru
        _
    $region6: #{tpu_custom_call.1} parent=1 // loop_footer
      %s23 = sadd.s32 1, %s19
    $region7: #{tpu_custom_call.1} parent=1 // loop_footer_branch
      %18 = sbr.rel target = $region3
    $region8: #{tpu_custom_call.1} parent=1 // loop_exit
      _
    %1007 = vsyncpa [#allocation5], 1
    %s1008 = scalar_lea.sflag [#allocation5], 1
    %1009 = vsyncpa %s1008, 1
    %1010 = vsyncpa [#allocation8], 1
    %1011 = vsyncpa [#allocation11], 1
    %1012 = vsyncpa [#allocation6], 1
    %s1013 = scalar_lea.sflag [#allocation6], 1
    %1014 = vsyncpa %s1013, 1

</llo_original>
